<compile_context>
chip_gen: v5e
topology: v5e:2x2
jax: 0.10.0
libtpu: 0.0.40
codegen_flags: <defaults>
</compile_context>

<pallas_src>
import jax
import jax.numpy as jnp
from jax.experimental import pallas as pl
from jax.experimental.pallas import tpu as pltpu


def _forward_model_kernel(s_ref, a_ref, w1s_ref, tab_ref, b1_ref, w2_ref, b2_ref, o_ref):
    """relu(s @ W1_state + onehot(a) @ action_tab + b1) @ W2 + b2, all in VMEM.

    s_ref  : (TB, F)      bf16  state features
    a_ref  : (TB, 1)      int32 action ids
    w1s_ref: (F, H)       bf16  state half of W1
    tab_ref: (A_pad, H)   bf16  precomputed  embedding @ W1_action  (zero-padded rows)
    b1_ref : (1, H)       f32
    w2_ref : (H, F)       bf16
    b2_ref : (1, F)       f32
    o_ref  : (TB, F)      f32/bf16  predicted next-state features
    """
    tb, _ = s_ref.shape
    a_pad = tab_ref.shape[0]

    # Fused embedding-gather + W1_action matmul: one-hot(actions) @ action_tab.
    # NOTE: when batch % TB != 0 the padded tail of a_ref holds garbage ids;
    # the one-hot construction keeps this safe (garbage either matches nothing
    # or a row < A_pad, never an OOB address), and those output rows are
    # discarded by the block writeback.
    act = a_ref[...]                                                   # (TB, 1)
    col = jax.lax.broadcasted_iota(jnp.int32, (tb, a_pad), 1)          # (TB, A_pad)
    onehot = (act == col).astype(tab_ref.dtype)                        # (TB, A_pad)

    h = (
        jnp.dot(s_ref[...], w1s_ref[...], preferred_element_type=jnp.float32)
        + jnp.dot(onehot, tab_ref[...], preferred_element_type=jnp.float32)
        + b1_ref[...]
    )
    h = jnp.maximum(h, 0.0)  # ReLU

    o_ref[...] = (
        jnp.dot(h.astype(w2_ref.dtype), w2_ref[...],
                preferred_element_type=jnp.float32)
        + b2_ref[...]
    ).astype(o_ref.dtype)


def _round_up(x, m):
    return ((x + m - 1) // m) * m


def forward_model(state_features, actions, params, *, batch_tile=2048,
                  out_dtype=jnp.float32):
    """Pallas-backed forward pass matching ForwardModel.forward."""
    batch, feat = state_features.shape
    num_actions = params["embedding"].shape[0]
    hidden = params["w1"].shape[1]

    # --- parameter prep (wrapper-side, runs once under jit) -----------------
    emb_f32 = params["embedding"].astype(jnp.float32)        # (A, F)
    w1_f32 = params["w1"].astype(jnp.float32)                # (2F, H)
    w1_state = w1_f32[:feat].astype(jnp.bfloat16)            # (F, H)
    # Table fold: embedding @ W1_action, computed in f32 then cast to bf16.
    action_tab = (emb_f32 @ w1_f32[feat:]).astype(jnp.bfloat16)   # (A, H)
    w2 = params["w2"].astype(jnp.bfloat16)                   # (H, F)
    b1 = params["b1"].astype(jnp.float32)                    # (1, H)
    b2 = params["b2"].astype(jnp.float32)                    # (1, F)

    s = state_features.astype(jnp.bfloat16)                  # (B, F)
    a = actions.reshape(-1, 1).astype(jnp.int32)             # (B, 1)

    # Zero-pad the tiny action table to a lane-aligned K for the one-hot matmul.
    a_pad = _round_up(num_actions, 128)
    if a_pad != num_actions:
        action_tab = jnp.pad(action_tab, ((0, a_pad - num_actions), (0, 0)))

    # --- batch tiling --------------------------------------------------------
    # Small batches: one grid step (latency bound, nothing to shard).
    # batch >= 256: at least 2 grid steps so the "parallel" batch axis spans
    # both v7x TensorCores; tile size a multiple of 16 (bf16 sublane packing),
    # capped at batch_tile to amortize the ~0.35 us per-step overhead.
    if batch < 256:
        tb = batch
    else:
        tb = min(batch_tile, _round_up(pl.cdiv(batch, 2), 16))
    grid = (pl.cdiv(batch, tb),)

    # Updated cost estimate for the folded-table arithmetic.
    cost = pl.CostEstimate(
        flops=2 * batch * (a_pad * hidden + feat * hidden + hidden * feat),
        transcendentals=0,
        bytes_accessed=(
            s.size * 2 + a.size * 4
            + w1_state.size * 2 + action_tab.size * 2 + b1.size * 4
            + w2.size * 2 + b2.size * 4
            + batch * feat * jnp.dtype(out_dtype).itemsize
        ),
    )

    out = pl.pallas_call(
        _forward_model_kernel,
        out_shape=jax.ShapeDtypeStruct((batch, feat), out_dtype),
        grid_spec=pltpu.PrefetchScalarGridSpec(
            num_scalar_prefetch=0,
            grid=grid,
            in_specs=[
                pl.BlockSpec((tb, feat), lambda i: (i, 0)),         # state tile
                pl.BlockSpec((tb, 1), lambda i: (i, 0)),            # action ids
                pl.BlockSpec((feat, hidden), lambda i: (0, 0)),     # W1 state half (resident)
                pl.BlockSpec((a_pad, hidden), lambda i: (0, 0)),    # folded action table (resident)
                pl.BlockSpec((1, hidden), lambda i: (0, 0)),        # b1
                pl.BlockSpec((hidden, feat), lambda i: (0, 0)),     # W2 (resident)
                pl.BlockSpec((1, feat), lambda i: (0, 0)),          # b2
            ],
            out_specs=pl.BlockSpec((tb, feat), lambda i: (i, 0)),
        ),
        compiler_params=pltpu.CompilerParams(
            dimension_semantics=("parallel",),
            # Explicit scoped-VMEM so large batch tiles don't trip v5e's 16 MiB
            # default; 32 MiB is safe on v5e/v6e/v7x alike.
            vmem_limit_bytes=32 * 1024 * 1024,
        ),
        cost_estimate=cost,
    )(s, a, w1_state, action_tab, b1, w2, b2)
    return out


def init_params(key, feature_dim, num_actions, hidden_dim):
    """Deterministic synthetic parameter init (shapes match the torch module)."""
    k_emb, k_w1, k_b1, k_w2, k_b2 = jax.random.split(key, 5)
    scale1 = 1.0 / jnp.sqrt(2.0 * feature_dim)
    scale2 = 1.0 / jnp.sqrt(1.0 * hidden_dim)
    return {
        "embedding": jax.random.normal(
            k_emb, (num_actions, feature_dim), jnp.float32
        ),
        "w1": jax.random.uniform(
            k_w1, (2 * feature_dim, hidden_dim), jnp.float32, -scale1, scale1
        ),
        "b1": jax.random.uniform(
            k_b1, (1, hidden_dim), jnp.float32, -scale1, scale1
        ),
        "w2": jax.random.uniform(
            k_w2, (hidden_dim, feature_dim), jnp.float32, -scale2, scale2
        ),
        "b2": jax.random.uniform(
            k_b2, (1, feature_dim), jnp.float32, -scale2, scale2
        ),
    }


def _reference(state_features, actions, params):
    """Pure-JAX f32 reference matching the torch module."""
    a = jnp.take(params["embedding"], actions, axis=0)
    x = jnp.concatenate([state_features, a], axis=1)
    h = jnp.maximum(x @ params["w1"] + params["b1"], 0.0)
    return h @ params["w2"] + params["b2"]


if __name__ == "__main__":
    # Module defaults: feature_dim=288, hidden_dim=256, num_actions=18; small batch.
    BATCH, FEATURE_DIM, HIDDEN_DIM, NUM_ACTIONS = 8, 288, 256, 18

    key = jax.random.PRNGKey(0)
    k_params, k_state, k_act = jax.random.split(key, 3)

    params = init_params(k_params, FEATURE_DIM, NUM_ACTIONS, HIDDEN_DIM)
    state_features = jax.random.normal(k_state, (BATCH, FEATURE_DIM), jnp.float32)
    actions = jax.random.randint(k_act, (BATCH,), 0, NUM_ACTIONS, jnp.int32)

    out = jax.block_until_ready(forward_model(state_features, actions, params))
    ref = _reference(state_features, actions, params)

    assert out.shape == (BATCH, FEATURE_DIM)
    assert out.dtype == jnp.float32
    # bf16 weights/activations + folded bf16 action table, f32 MXU accumulation,
    # compared against an all-f32 reference.
    max_err = float(jnp.max(jnp.abs(out - ref)))
    assert jnp.allclose(out, ref, atol=2e-2, rtol=2e-2), max_err

    print("KERNEL_OK")
</pallas_src>

<mosaic_0001>
module attributes {stable_mosaic.version = 11 : i64} {
  func.func @_forward_model_kernel(%arg0: i32, %arg1: memref<8x288xbf16, #tpu.memory_space<vmem>>, %arg2: memref<8x1xi32, #tpu.memory_space<vmem>>, %arg3: memref<288x256xbf16, #tpu.memory_space<vmem>>, %arg4: memref<128x256xbf16, #tpu.memory_space<vmem>>, %arg5: memref<1x256xf32, #tpu.memory_space<vmem>>, %arg6: memref<256x288xbf16, #tpu.memory_space<vmem>>, %arg7: memref<1x288xf32, #tpu.memory_space<vmem>>, %arg8: memref<8x288xf32, #tpu.memory_space<vmem>>) attributes {dimension_semantics = [#tpu.dimension_semantics<parallel>], iteration_bounds = array<i64: 1>, scalar_prefetch = 0 : i64, scratch_operands = 0 : i64, tpu.core_type = #tpu.core_type<tc>, window_params = [{transform_indices = @transform_0, window_bounds = array<i64: 8, 288>}, {transform_indices = @transform_1, window_bounds = array<i64: 8, 1>}, {pipeline_mode = #tpu.pipeline_mode<synchronous>, transform_indices = @transform_2, window_bounds = array<i64: 288, 256>}, {pipeline_mode = #tpu.pipeline_mode<synchronous>, transform_indices = @transform_3, window_bounds = array<i64: 128, 256>}, {pipeline_mode = #tpu.pipeline_mode<synchronous>, transform_indices = @transform_4, window_bounds = array<i64: 1, 256>}, {pipeline_mode = #tpu.pipeline_mode<synchronous>, transform_indices = @transform_5, window_bounds = array<i64: 256, 288>}, {pipeline_mode = #tpu.pipeline_mode<synchronous>, transform_indices = @transform_6, window_bounds = array<i64: 1, 288>}, {transform_indices = @transform_7, window_bounds = array<i64: 8, 288>}]} {
    %c0 = arith.constant 0 : index
    %c0_0 = arith.constant 0 : index
    %0 = vector.load %arg2[%c0, %c0_0] : memref<8x1xi32, #tpu.memory_space<vmem>>, vector<8x1xi32>
    %1 = tpu.iota {dimensions = array<i32: 1>} : vector<8x128xi32>
    %2 = vector.broadcast %0 : vector<8x1xi32> to vector<8x128xi32>
    %3 = arith.cmpi eq, %2, %1 : vector<8x128xi32>
    %4 = arith.extui %3 : vector<8x128xi1> to vector<8x128xi32>
    %5 = arith.sitofp %4 : vector<8x128xi32> to vector<8x128xf32>
    %6 = arith.truncf %5 : vector<8x128xf32> to vector<8x128xbf16>
    %c0_1 = arith.constant 0 : index
    %c0_2 = arith.constant 0 : index
    %7 = vector.load %arg1[%c0_1, %c0_2] : memref<8x288xbf16, #tpu.memory_space<vmem>>, vector<8x288xbf16>
    %c0_3 = arith.constant 0 : index
    %c0_4 = arith.constant 0 : index
    %8 = vector.load %arg3[%c0_3, %c0_4] : memref<288x256xbf16, #tpu.memory_space<vmem>>, vector<288x256xbf16>
    %cst = arith.constant dense<0.000000e+00> : vector<8x256xf32>
    %9 = tpu.matmul %7, %8, %cst {dimension_numbers = #tpu.dot_dimension_numbers<[1], [0], [0], [1], [0, 0, 1, 1], [], []>} : vector<8x288xbf16>, vector<288x256xbf16>, vector<8x256xf32> -> vector<8x256xf32>
    %c0_5 = arith.constant 0 : index
    %c0_6 = arith.constant 0 : index
    %10 = vector.load %arg4[%c0_5, %c0_6] : memref<128x256xbf16, #tpu.memory_space<vmem>>, vector<128x256xbf16>
    %cst_7 = arith.constant dense<0.000000e+00> : vector<8x256xf32>
    %11 = tpu.matmul %6, %10, %cst_7 {dimension_numbers = #tpu.dot_dimension_numbers<[1], [0], [0], [1], [0, 0, 1, 1], [], []>} : vector<8x128xbf16>, vector<128x256xbf16>, vector<8x256xf32> -> vector<8x256xf32>
    %12 = arith.addf %9, %11 : vector<8x256xf32>
    %c0_8 = arith.constant 0 : index
    %c0_9 = arith.constant 0 : index
    %13 = vector.load %arg5[%c0_8, %c0_9] : memref<1x256xf32, #tpu.memory_space<vmem>>, vector<1x256xf32>
    %14 = vector.broadcast %13 : vector<1x256xf32> to vector<8x256xf32>
    %15 = arith.addf %12, %14 : vector<8x256xf32>
    %cst_10 = arith.constant 0.000000e+00 : f32
    %16 = vector.broadcast %cst_10 : f32 to vector<8x256xf32>
    %17 = arith.maximumf %15, %16 : vector<8x256xf32>
    %18 = arith.truncf %17 : vector<8x256xf32> to vector<8x256xbf16>
    %c0_11 = arith.constant 0 : index
    %c0_12 = arith.constant 0 : index
    %19 = vector.load %arg6[%c0_11, %c0_12] : memref<256x288xbf16, #tpu.memory_space<vmem>>, vector<256x288xbf16>
    %cst_13 = arith.constant dense<0.000000e+00> : vector<8x288xf32>
    %20 = tpu.matmul %18, %19, %cst_13 {dimension_numbers = #tpu.dot_dimension_numbers<[1], [0], [0], [1], [0, 0, 1, 1], [], []>} : vector<8x256xbf16>, vector<256x288xbf16>, vector<8x288xf32> -> vector<8x288xf32>
    %c0_14 = arith.constant 0 : index
    %c0_15 = arith.constant 0 : index
    %21 = vector.load %arg7[%c0_14, %c0_15] : memref<1x288xf32, #tpu.memory_space<vmem>>, vector<1x288xf32>
    %22 = vector.broadcast %21 : vector<1x288xf32> to vector<8x288xf32>
    %23 = arith.addf %20, %22 : vector<8x288xf32>
    %c0_16 = arith.constant 0 : index
    %c0_17 = arith.constant 0 : index
    %24 = vector.load %arg8[%c0_16, %c0_17] : memref<8x288xf32, #tpu.memory_space<vmem>>, vector<8x288xf32>
    tpu.vector_store %arg8[%c0_16, %c0_17], %23 {strides = array<i32>} : memref<8x288xf32, #tpu.memory_space<vmem>>, vector<8x288xf32>,
    return
  }
  func.func @transform_0(%arg0: i32) -> (i32, i32) {
    %c0_i32 = arith.constant 0 : i32
    %c0_i32_0 = arith.constant 0 : i32
    return %arg0, %c0_i32 : i32, i32
  }
  func.func @transform_1(%arg0: i32) -> (i32, i32) {
    %c0_i32 = arith.constant 0 : i32
    %c0_i32_0 = arith.constant 0 : i32
    return %arg0, %c0_i32 : i32, i32
  }
  func.func @transform_2(%arg0: i32) -> (i32, i32) {
    %c0_i32 = arith.constant 0 : i32
    %c0_i32_0 = arith.constant 0 : i32
    %c0_i32_1 = arith.constant 0 : i32
    return %c0_i32, %c0_i32_0 : i32, i32
  }
  func.func @transform_3(%arg0: i32) -> (i32, i32) {
    %c0_i32 = arith.constant 0 : i32
    %c0_i32_0 = arith.constant 0 : i32
    %c0_i32_1 = arith.constant 0 : i32
    return %c0_i32, %c0_i32_0 : i32, i32
  }
  func.func @transform_4(%arg0: i32) -> (i32, i32) {
    %c0_i32 = arith.constant 0 : i32
    %c0_i32_0 = arith.constant 0 : i32
    %c0_i32_1 = arith.constant 0 : i32
    return %c0_i32, %c0_i32_0 : i32, i32
  }
  func.func @transform_5(%arg0: i32) -> (i32, i32) {
    %c0_i32 = arith.constant 0 : i32
    %c0_i32_0 = arith.constant 0 : i32
    %c0_i32_1 = arith.constant 0 : i32
    return %c0_i32, %c0_i32_0 : i32, i32
  }
  func.func @transform_6(%arg0: i32) -> (i32, i32) {
    %c0_i32 = arith.constant 0 : i32
    %c0_i32_0 = arith.constant 0 : i32
    %c0_i32_1 = arith.constant 0 : i32
    return %c0_i32, %c0_i32_0 : i32, i32
  }
  func.func @transform_7(%arg0: i32) -> (i32, i32) {
    %c0_i32 = arith.constant 0 : i32
    %c0_i32_0 = arith.constant 0 : i32
    return %arg0, %c0_i32 : i32, i32
  }
}

</mosaic_0001>

<llo_original>
// kernel: tpu_custom_call.1
$region0: #{tpu_custom_call.1}
  #allocation0 [shape = 'u32[]', space=smem, size = 0x4, offset = 0x4, fixed_abs, tag = 'smem constant byte address 0x4 - core index']
  #allocation1 [shape = 'u32[72,128]{1,0:T(1,128)}', space=vmem, size = 0x9000, scoped, tag = 'internal scratch']
  %s0 = inlined_call_operand.vmem [shape: bf16[8,288], index: 0, kind: input, shape index: {}]
  %s1 = inlined_call_operand.vmem [shape: s32[8,1], index: 1, kind: input, shape index: {}]
  %s2 = inlined_call_operand.vmem [shape: bf16[288,256], index: 2, kind: input, shape index: {}]
  %s3 = inlined_call_operand.vmem [shape: bf16[128,256], index: 3, kind: input, shape index: {}]
  %s4 = inlined_call_operand.vmem [shape: f32[1,256], index: 4, kind: input, shape index: {}]
  %s5 = inlined_call_operand.vmem [shape: bf16[256,288], index: 5, kind: input, shape index: {}]
  %s6 = inlined_call_operand.vmem [shape: f32[1,288], index: 6, kind: input, shape index: {}]
  %s7 = inlined_call_operand.hbm [shape: f32[8,288], index: 7, kind: output, shape index: {}]
  %s8 = sld [smem:[#allocation0]]
  $region38: #{tpu_custom_call.1} parent=0
    _
  %s10 = ssub.s32 1, %s8
  %s11 = scalar_select 0, %s10, %s8
  $region1: #{tpu_custom_call.1} parent=0
    #allocation2 [shape = 'u8[12288]{0}', space=vmem, size = 0x3000, scoped, tag = 'output window, operand 0, single buffered']
    #allocation3 [shape = 's32[1]{0}', space=sflag, size = 0x4, scoped, tag = 'scoped memory for tpu_custom_call.1']
    %12 = vsyncpa [#allocation3], 0
    // Predicated region
    $region2: #{tpu_custom_call.1} parent=1 // pred_check
      _
    $region3: #{tpu_custom_call.1} parent=1 // pred_check_branch
      %14 = sbr.rel (0) target = $region5
    $region4: #{tpu_custom_call.1} parent=1 // pred_region
      _
    $region5: #{tpu_custom_call.1} parent=1 // pred_fallthru
      _
    // Predicated region
    $region6: #{tpu_custom_call.1} parent=1 // pred_check
      _
    $region7: #{tpu_custom_call.1} parent=1 // pred_check_branch
      %16 = sbr.rel (0) target = $region9
    $region8: #{tpu_custom_call.1} parent=1 // pred_region
      _
    $region9: #{tpu_custom_call.1} parent=1 // pred_fallthru
      _
    // Predicated region
    $region10: #{tpu_custom_call.1} parent=1 // pred_check
      _
    $region11: #{tpu_custom_call.1} parent=1 // pred_check_branch
      %18 = sbr.rel (0) target = $region13
    $region12: #{tpu_custom_call.1} parent=1 // pred_region
      _
    $region13: #{tpu_custom_call.1} parent=1 // pred_fallthru
      _
    // Predicated region
    $region14: #{tpu_custom_call.1} parent=1 // pred_check
      _
    $region15: #{tpu_custom_call.1} parent=1 // pred_check_branch
      %20 = sbr.rel (0) target = $region17
    $region16: #{tpu_custom_call.1} parent=1 // pred_region
      _
    $region17: #{tpu_custom_call.1} parent=1 // pred_fallthru
      _
    // Predicated region
    $region18: #{tpu_custom_call.1} parent=1 // pred_check
      _
    $region19: #{tpu_custom_call.1} parent=1 // pred_check_branch
      %22 = sbr.rel (0) target = $region21
    $region20: #{tpu_custom_call.1} parent=1 // pred_region
      _
    $region21: #{tpu_custom_call.1} parent=1 // pred_fallthru
      _
    // Predicated region
    $region22: #{tpu_custom_call.1} parent=1 // pred_check
      _
    $region23: #{tpu_custom_call.1} parent=1 // pred_check_branch
      %24 = sbr.rel (0) target = $region25
    $region24: #{tpu_custom_call.1} parent=1 // pred_region
      _
    $region25: #{tpu_custom_call.1} parent=1 // pred_fallthru
      _
    // Predicated region
    $region26: #{tpu_custom_call.1} parent=1 // pred_check
      _
    $region27: #{tpu_custom_call.1} parent=1 // pred_check_branch
      %26 = sbr.rel (0) target = $region29
    $region28: #{tpu_custom_call.1} parent=1 // pred_region
      _
    $region29: #{tpu_custom_call.1} parent=1 // pred_fallthru
      _
    %v28 = vld [vmem:[%s1] sm:$0xff]
    %v29 = vlaneseq
    %v30 = vand.u32 %v29, 127
    %31 = vset.pattern.permute.xlu0 0
    %32 = vperm.xlu0 %31, %v28
    %v33 = vpop.permute.xlu0 %32
    %vm34 = vcmp.eq.s32.totalorder %v33, %v30
    %v35 = vsel %vm34, 1, 0
    %v36 = vcvt.s32.f32 %v35
    %v37 = vpack.c.bf16 %v36, %v36
    %v38 = vld [vmem:[%s0] sm:$0xff]
    %v39 = vld [vmem:[%s0 + $0x8] sm:$0xf]
    %v40 = vld [vmem:[%s2] sm:$0xff]
    %v41 = vld [vmem:[%s2 + $0x8] sm:$0xff]
    %v42 = vld [vmem:[%s2 + $0x10] sm:$0xff]
    %v43 = vld [vmem:[%s2 + $0x18] sm:$0xff]
    %v44 = vld [vmem:[%s2 + $0x20] sm:$0xff]
    %v45 = vld [vmem:[%s2 + $0x28] sm:$0xff]
    %v46 = vld [vmem:[%s2 + $0x30] sm:$0xff]
    %v47 = vld [vmem:[%s2 + $0x38] sm:$0xff]
    %v48 = vld [vmem:[%s2 + $0x40] sm:$0xff]
    %v49 = vld [vmem:[%s2 + $0x48] sm:$0xff]
    %v50 = vld [vmem:[%s2 + $0x50] sm:$0xff]
    %v51 = vld [vmem:[%s2 + $0x58] sm:$0xff]
    %v52 = vld [vmem:[%s2 + $0x60] sm:$0xff]
    %v53 = vld [vmem:[%s2 + $0x68] sm:$0xff]
    %v54 = vld [vmem:[%s2 + $0x70] sm:$0xff]
    %v55 = vld [vmem:[%s2 + $0x78] sm:$0xff]
    %v56 = vld [vmem:[%s2 + $0x80] sm:$0xff]
    %v57 = vld [vmem:[%s2 + $0x88] sm:$0xff]
    %v58 = vld [vmem:[%s2 + $0x90] sm:$0xff]
    %v59 = vld [vmem:[%s2 + $0x98] sm:$0xff]
    %v60 = vld [vmem:[%s2 + $0xa0] sm:$0xff]
    %v61 = vld [vmem:[%s2 + $0xa8] sm:$0xff]
    %v62 = vld [vmem:[%s2 + $0xb0] sm:$0xff]
    %v63 = vld [vmem:[%s2 + $0xb8] sm:$0xff]
    %v64 = vld [vmem:[%s2 + $0xc0] sm:$0xff]
    %v65 = vld [vmem:[%s2 + $0xc8] sm:$0xff]
    %v66 = vld [vmem:[%s2 + $0xd0] sm:$0xff]
    %v67 = vld [vmem:[%s2 + $0xd8] sm:$0xff]
    %v68 = vld [vmem:[%s2 + $0xe0] sm:$0xff]
    %v69 = vld [vmem:[%s2 + $0xe8] sm:$0xff]
    %v70 = vld [vmem:[%s2 + $0xf0] sm:$0xff]
    %v71 = vld [vmem:[%s2 + $0xf8] sm:$0xff]
    %v72 = vld [vmem:[%s2 + $0x100] sm:$0xff]
    %v73 = vld [vmem:[%s2 + $0x108] sm:$0xff]
    %v74 = vld [vmem:[%s2 + $0x110] sm:$0xff]
    %v75 = vld [vmem:[%s2 + $0x118] sm:$0xff]
    %v76 = vld [vmem:[%s3] sm:$0xff]
    %v77 = vld [vmem:[%s3 + $0x8] sm:$0xff]
    %v78 = vld [vmem:[%s3 + $0x10] sm:$0xff]
    %v79 = vld [vmem:[%s3 + $0x18] sm:$0xff]
    %v80 = vld [vmem:[%s3 + $0x20] sm:$0xff]
    %v81 = vld [vmem:[%s3 + $0x28] sm:$0xff]
    %v82 = vld [vmem:[%s3 + $0x30] sm:$0xff]
    %v83 = vld [vmem:[%s3 + $0x38] sm:$0xff]
    %v84 = vld [vmem:[%s3 + $0x40] sm:$0xff]
    %v85 = vld [vmem:[%s3 + $0x48] sm:$0xff]
    %v86 = vld [vmem:[%s3 + $0x50] sm:$0xff]
    %v87 = vld [vmem:[%s3 + $0x58] sm:$0xff]
    %v88 = vld [vmem:[%s3 + $0x60] sm:$0xff]
    %v89 = vld [vmem:[%s3 + $0x68] sm:$0xff]
    %v90 = vld [vmem:[%s3 + $0x70] sm:$0xff]
    %v91 = vld [vmem:[%s3 + $0x78] sm:$0xff]
    %v108 = vunpack.c.l.b16 %v76
    %v109 = vunpack.c.h.b16 %v76
    %v110 = vunpack.c.l.b16 %v77
    %v111 = vunpack.c.h.b16 %v77
    %v112 = vunpack.c.l.b16 %v78
    %v113 = vunpack.c.h.b16 %v78
    %v114 = vunpack.c.l.b16 %v79
    %v115 = vunpack.c.h.b16 %v79
    %v116 = vunpack.c.l.b16 %v80
    %v117 = vunpack.c.h.b16 %v80
    %v118 = vunpack.c.l.b16 %v81
    %v119 = vunpack.c.h.b16 %v81
    %v120 = vunpack.c.l.b16 %v82
    %v121 = vunpack.c.h.b16 %v82
    %v122 = vunpack.c.l.b16 %v83
    %v123 = vunpack.c.h.b16 %v83
    %v124 = vunpack.c.l.b16 %v84
    %v125 = vunpack.c.h.b16 %v84
    %v126 = vunpack.c.l.b16 %v85
    %v127 = vunpack.c.h.b16 %v85
    %v128 = vunpack.c.l.b16 %v86
    %v129 = vunpack.c.h.b16 %v86
    %v130 = vunpack.c.l.b16 %v87
    %v131 = vunpack.c.h.b16 %v87
    %v132 = vunpack.c.l.b16 %v88
    %v133 = vunpack.c.h.b16 %v88
    %v134 = vunpack.c.l.b16 %v89
    %v135 = vunpack.c.h.b16 %v89
    %v136 = vunpack.c.l.b16 %v90
    %v137 = vunpack.c.h.b16 %v90
    %v138 = vunpack.c.l.b16 %v91
    %v139 = vunpack.c.h.b16 %v91
    %v140 = vpack.c.b16 %v110, %v108
    %v141 = vpack.c.b16 %v111, %v109
    %v142 = vpack.c.b16 %v114, %v112
    %v143 = vpack.c.b16 %v115, %v113
    %v144 = vpack.c.b16 %v118, %v116
    %v145 = vpack.c.b16 %v119, %v117
    %v146 = vpack.c.b16 %v122, %v120
    %v147 = vpack.c.b16 %v123, %v121
    %v148 = vpack.c.b16 %v126, %v124
    %v149 = vpack.c.b16 %v127, %v125
    %v150 = vpack.c.b16 %v130, %v128
    %v151 = vpack.c.b16 %v131, %v129
    %v152 = vpack.c.b16 %v134, %v132
    %v153 = vpack.c.b16 %v135, %v133
    %v154 = vpack.c.b16 %v138, %v136
    %v155 = vpack.c.b16 %v139, %v137
    %172 = vmatpush.bf16.msra.mxu0 %v154
    %173 = vmatpush.bf16.msra.mxu0 %v152
    %174 = vmatpush.bf16.msra.mxu0 %v150
    %175 = vmatpush.bf16.msra.mxu0 %v148
    %176 = vmatpush.bf16.msra.mxu0 %v146
    %177 = vmatpush.bf16.msra.mxu0 %v144
    %178 = vmatpush.bf16.msra.mxu0 %v142
    %179 = vmatpush.bf16.msra.mxu0 %v140
    %180 = vmatmul.bf16.gmra.mxu0 %v37
    %v181 = vpop.f32.mrf.mxu0
    %v182 = vadd.f32 0.0, %v181
    %v183 = vpop.f32.mrf.mxu0
    %184 = vdwg.mxu0
    %185 = vmatpush.bf16.msra.mxu0 %v155
    %186 = vmatpush.bf16.msra.mxu0 %v153
    %187 = vmatpush.bf16.msra.mxu0 %v151
    %188 = vmatpush.bf16.msra.mxu0 %v149
    %189 = vmatpush.bf16.msra.mxu0 %v147
    %190 = vmatpush.bf16.msra.mxu0 %v145
    %191 = vmatpush.bf16.msra.mxu0 %v143
    %192 = vmatpush.bf16.msra.mxu0 %v141
    %193 = vmatmul.bf16.gmra.mxu0 %v37
    %v194 = vpop.f32.mrf.mxu0
    %v195 = vadd.f32 0.0, %v194
    %v196 = vpop.f32.mrf.mxu0
    %197 = vdwg.mxu0
    %v200 = vunpack.c.l.b16 %v38
    %v201 = vunpack.c.h.b16 %v38
    %v202 = vunpack.c.l.b16 %v39
    %v203 = vpack.c.b16 %v200, %v200
    %v204 = vpack.c.b16 %v201, %v201
    %v205 = vpack.c.b16 %v202, %v202
    %v244 = vunpack.c.l.b16 %v40
    %v245 = vunpack.c.h.b16 %v40
    %v246 = vunpack.c.l.b16 %v41
    %v247 = vunpack.c.h.b16 %v41
    %v248 = vunpack.c.l.b16 %v42
    %v249 = vunpack.c.h.b16 %v42
    %v250 = vunpack.c.l.b16 %v43
    %v251 = vunpack.c.h.b16 %v43
    %v252 = vunpack.c.l.b16 %v44
    %v253 = vunpack.c.h.b16 %v44
    %v254 = vunpack.c.l.b16 %v45
    %v255 = vunpack.c.h.b16 %v45
    %v256 = vunpack.c.l.b16 %v46
    %v257 = vunpack.c.h.b16 %v46
    %v258 = vunpack.c.l.b16 %v47
    %v259 = vunpack.c.h.b16 %v47
    %v260 = vunpack.c.l.b16 %v48
    %v261 = vunpack.c.h.b16 %v48
    %v262 = vunpack.c.l.b16 %v49
    %v263 = vunpack.c.h.b16 %v49
    %v264 = vunpack.c.l.b16 %v50
    %v265 = vunpack.c.h.b16 %v50
    %v266 = vunpack.c.l.b16 %v51
    %v267 = vunpack.c.h.b16 %v51
    %v268 = vunpack.c.l.b16 %v52
    %v269 = vunpack.c.h.b16 %v52
    %v270 = vunpack.c.l.b16 %v53
    %v271 = vunpack.c.h.b16 %v53
    %v272 = vunpack.c.l.b16 %v54
    %v273 = vunpack.c.h.b16 %v54
    %v274 = vunpack.c.l.b16 %v55
    %v275 = vunpack.c.h.b16 %v55
    %v276 = vunpack.c.l.b16 %v56
    %v277 = vunpack.c.h.b16 %v56
    %v278 = vunpack.c.l.b16 %v57
    %v279 = vunpack.c.h.b16 %v57
    %v280 = vunpack.c.l.b16 %v58
    %v281 = vunpack.c.h.b16 %v58
    %v282 = vunpack.c.l.b16 %v59
    %v283 = vunpack.c.h.b16 %v59
    %v284 = vunpack.c.l.b16 %v60
    %v285 = vunpack.c.h.b16 %v60
    %v286 = vunpack.c.l.b16 %v61
    %v287 = vunpack.c.h.b16 %v61
    %v288 = vunpack.c.l.b16 %v62
    %v289 = vunpack.c.h.b16 %v62
    %v290 = vunpack.c.l.b16 %v63
    %v291 = vunpack.c.h.b16 %v63
    %v292 = vunpack.c.l.b16 %v64
    %v293 = vunpack.c.h.b16 %v64
    %v294 = vunpack.c.l.b16 %v65
    %v295 = vunpack.c.h.b16 %v65
    %v296 = vunpack.c.l.b16 %v66
    %v297 = vunpack.c.h.b16 %v66
    %v298 = vunpack.c.l.b16 %v67
    %v299 = vunpack.c.h.b16 %v67
    %v300 = vunpack.c.l.b16 %v68
    %v301 = vunpack.c.h.b16 %v68
    %v302 = vunpack.c.l.b16 %v69
    %v303 = vunpack.c.h.b16 %v69
    %v304 = vunpack.c.l.b16 %v70
    %v305 = vunpack.c.h.b16 %v70
    %v306 = vunpack.c.l.b16 %v71
    %v307 = vunpack.c.h.b16 %v71
    %v308 = vunpack.c.l.b16 %v72
    %v309 = vunpack.c.h.b16 %v72
    %v310 = vunpack.c.l.b16 %v73
    %v311 = vunpack.c.h.b16 %v73
    %v312 = vunpack.c.l.b16 %v74
    %v313 = vunpack.c.h.b16 %v74
    %v314 = vunpack.c.l.b16 %v75
    %v315 = vunpack.c.h.b16 %v75
    %v316 = vpack.c.b16 %v246, %v244
    %v317 = vpack.c.b16 %v247, %v245
    %v318 = vpack.c.b16 %v250, %v248
    %v319 = vpack.c.b16 %v251, %v249
    %v320 = vpack.c.b16 %v254, %v252
    %v321 = vpack.c.b16 %v255, %v253
    %v322 = vpack.c.b16 %v258, %v256
    %v323 = vpack.c.b16 %v259, %v257
    %v324 = vpack.c.b16 %v262, %v260
    %v325 = vpack.c.b16 %v263, %v261
    %v326 = vpack.c.b16 %v266, %v264
    %v327 = vpack.c.b16 %v267, %v265
    %v328 = vpack.c.b16 %v270, %v268
    %v329 = vpack.c.b16 %v271, %v269
    %v330 = vpack.c.b16 %v274, %v272
    %v331 = vpack.c.b16 %v275, %v273
    %v332 = vpack.c.b16 %v278, %v276
    %v333 = vpack.c.b16 %v279, %v277
    %v334 = vpack.c.b16 %v282, %v280
    %v335 = vpack.c.b16 %v283, %v281
    %v336 = vpack.c.b16 %v286, %v284
    %v337 = vpack.c.b16 %v287, %v285
    %v338 = vpack.c.b16 %v290, %v288
    %v339 = vpack.c.b16 %v291, %v289
    %v340 = vpack.c.b16 %v294, %v292
    %v341 = vpack.c.b16 %v295, %v293
    %v342 = vpack.c.b16 %v298, %v296
    %v343 = vpack.c.b16 %v299, %v297
    %v344 = vpack.c.b16 %v302, %v300
    %v345 = vpack.c.b16 %v303, %v301
    %v346 = vpack.c.b16 %v306, %v304
    %v347 = vpack.c.b16 %v307, %v305
    %v348 = vpack.c.b16 %v310, %v308
    %v349 = vpack.c.b16 %v311, %v309
    %v350 = vpack.c.b16 %v314, %v312
    %v351 = vpack.c.b16 %v315, %v313
    %vm388 = vcmask 261120
    %v390 = vsel %vm388, %v205, 0
    %392 = vmatpush.bf16.msra.mxu0 %v330
    %393 = vmatpush.bf16.msra.mxu0 %v328
    %394 = vmatpush.bf16.msra.mxu0 %v326
    %395 = vmatpush.bf16.msra.mxu0 %v324
    %396 = vmatpush.bf16.msra.mxu0 %v322
    %397 = vmatpush.bf16.msra.mxu0 %v320
    %398 = vmatpush.bf16.msra.mxu0 %v318
    %399 = vmatpush.bf16.msra.mxu0 %v316
    %400 = vmatmul.bf16.gmra.mxu0 %v203
    %v401 = vpop.f32.mrf.mxu0
    %v402 = vadd.f32 %v182, %v401
    %v403 = vpop.f32.mrf.mxu0
    %404 = vdwg.mxu0
    %405 = vmatpush.bf16.msra.mxu0 %v346
    %406 = vmatpush.bf16.msra.mxu0 %v344
    %407 = vmatpush.bf16.msra.mxu0 %v342
    %408 = vmatpush.bf16.msra.mxu0 %v340
    %409 = vmatpush.bf16.msra.mxu0 %v338
    %410 = vmatpush.bf16.msra.mxu0 %v336
    %411 = vmatpush.bf16.msra.mxu0 %v334
    %412 = vmatpush.bf16.msra.mxu0 %v332
    %413 = vmatmul.bf16.gmra.mxu0 %v204
    %v414 = vpop.f32.mrf.mxu0
    %v415 = vadd.f32 %v402, %v414
    %v416 = vpop.f32.mrf.mxu0
    %417 = vdwg.mxu0
    %418 = vmatpush.bf16.msra.mxu0 0
    %419 = vmatpush.bf16.msra.mxu0 0
    %420 = vmatpush.bf16.msra.mxu0 0
    %421 = vmatpush.bf16.msra.mxu0 0
    %422 = vmatpush.bf16.msra.mxu0 0
    %423 = vmatpush.bf16.msra.mxu0 0
    %424 = vmatpush.bf16.msra.mxu0 %v350
    %425 = vmatpush.bf16.msra.mxu0 %v348
    %426 = vmatmul.bf16.gmra.mxu0 %v390
    %v427 = vpop.f32.mrf.mxu0
    %v428 = vadd.f32 %v415, %v427
    %v429 = vpop.f32.mrf.mxu0
    %430 = vdwg.mxu0
    %431 = vmatpush.bf16.msra.mxu0 %v331
    %432 = vmatpush.bf16.msra.mxu0 %v329
    %433 = vmatpush.bf16.msra.mxu0 %v327
    %434 = vmatpush.bf16.msra.mxu0 %v325
    %435 = vmatpush.bf16.msra.mxu0 %v323
    %436 = vmatpush.bf16.msra.mxu0 %v321
    %437 = vmatpush.bf16.msra.mxu0 %v319
    %438 = vmatpush.bf16.msra.mxu0 %v317
    %439 = vmatmul.bf16.gmra.mxu0 %v203
    %v440 = vpop.f32.mrf.mxu0
    %v441 = vadd.f32 %v195, %v440
    %v442 = vpop.f32.mrf.mxu0
    %443 = vdwg.mxu0
    %444 = vmatpush.bf16.msra.mxu0 %v347
    %445 = vmatpush.bf16.msra.mxu0 %v345
    %446 = vmatpush.bf16.msra.mxu0 %v343
    %447 = vmatpush.bf16.msra.mxu0 %v341
    %448 = vmatpush.bf16.msra.mxu0 %v339
    %449 = vmatpush.bf16.msra.mxu0 %v337
    %450 = vmatpush.bf16.msra.mxu0 %v335
    %451 = vmatpush.bf16.msra.mxu0 %v333
    %452 = vmatmul.bf16.gmra.mxu0 %v204
    %v453 = vpop.f32.mrf.mxu0
    %v454 = vadd.f32 %v441, %v453
    %v455 = vpop.f32.mrf.mxu0
    %456 = vdwg.mxu0
    %457 = vmatpush.bf16.msra.mxu0 0
    %458 = vmatpush.bf16.msra.mxu0 0
    %459 = vmatpush.bf16.msra.mxu0 0
    %460 = vmatpush.bf16.msra.mxu0 0
    %461 = vmatpush.bf16.msra.mxu0 0
    %462 = vmatpush.bf16.msra.mxu0 0
    %463 = vmatpush.bf16.msra.mxu0 %v351
    %464 = vmatpush.bf16.msra.mxu0 %v349
    %465 = vmatmul.bf16.gmra.mxu0 %v390
    %v466 = vpop.f32.mrf.mxu0
    %v467 = vadd.f32 %v454, %v466
    %v468 = vpop.f32.mrf.mxu0
    %469 = vdwg.mxu0
    %v470 = vld [vmem:[%s4] sm:$0x3]
    %v472 = vperm.slane %v470, 0
    %v473 = vperm.slane %v470, 1
    %v476 = vadd.f32 %v428, %v472
    %v477 = vadd.f32 %v467, %v473
    %v478 = vmax.f32 %v476, 0.0
    %v479 = vmax.f32 %v477, 0.0
    %v480 = vpack.c.bf16 %v478, %v478
    %v481 = vpack.c.bf16 %v479, %v479
    %v482 = vld [vmem:[%s5] sm:$0xff]
    %v483 = vld [vmem:[%s5 + $0x8] sm:$0xf]
    %v484 = vld [vmem:[%s5 + $0xc] sm:$0xff]
    %v485 = vld [vmem:[%s5 + $0x14] sm:$0xf]
    %v486 = vld [vmem:[%s5 + $0x18] sm:$0xff]
    %v487 = vld [vmem:[%s5 + $0x20] sm:$0xf]
    %v488 = vld [vmem:[%s5 + $0x24] sm:$0xff]
    %v489 = vld [vmem:[%s5 + $0x2c] sm:$0xf]
    %v490 = vld [vmem:[%s5 + $0x30] sm:$0xff]
    %v491 = vld [vmem:[%s5 + $0x38] sm:$0xf]
    %v492 = vld [vmem:[%s5 + $0x3c] sm:$0xff]
    %v493 = vld [vmem:[%s5 + $0x44] sm:$0xf]
    %v494 = vld [vmem:[%s5 + $0x48] sm:$0xff]
    %v495 = vld [vmem:[%s5 + $0x50] sm:$0xf]
    %v496 = vld [vmem:[%s5 + $0x54] sm:$0xff]
    %v497 = vld [vmem:[%s5 + $0x5c] sm:$0xf]
    %v498 = vld [vmem:[%s5 + $0x60] sm:$0xff]
    %v499 = vld [vmem:[%s5 + $0x68] sm:$0xf]
    %v500 = vld [vmem:[%s5 + $0x6c] sm:$0xff]
    %v501 = vld [vmem:[%s5 + $0x74] sm:$0xf]
    %v502 = vld [vmem:[%s5 + $0x78] sm:$0xff]
    %v503 = vld [vmem:[%s5 + $0x80] sm:$0xf]
    %v504 = vld [vmem:[%s5 + $0x84] sm:$0xff]
    %v505 = vld [vmem:[%s5 + $0x8c] sm:$0xf]
    %v506 = vld [vmem:[%s5 + $0x90] sm:$0xff]
    %v507 = vld [vmem:[%s5 + $0x98] sm:$0xf]
    %v508 = vld [vmem:[%s5 + $0x9c] sm:$0xff]
    %v509 = vld [vmem:[%s5 + $0xa4] sm:$0xf]
    %v510 = vld [vmem:[%s5 + $0xa8] sm:$0xff]
    %v511 = vld [vmem:[%s5 + $0xb0] sm:$0xf]
    %v512 = vld [vmem:[%s5 + $0xb4] sm:$0xff]
    %v513 = vld [vmem:[%s5 + $0xbc] sm:$0xf]
    %v514 = vld [vmem:[%s5 + $0xc0] sm:$0xff]
    %v515 = vld [vmem:[%s5 + $0xc8] sm:$0xf]
    %v516 = vld [vmem:[%s5 + $0xcc] sm:$0xff]
    %v517 = vld [vmem:[%s5 + $0xd4] sm:$0xf]
    %v518 = vld [vmem:[%s5 + $0xd8] sm:$0xff]
    %v519 = vld [vmem:[%s5 + $0xe0] sm:$0xf]
    %v520 = vld [vmem:[%s5 + $0xe4] sm:$0xff]
    %v521 = vld [vmem:[%s5 + $0xec] sm:$0xf]
    %v522 = vld [vmem:[%s5 + $0xf0] sm:$0xff]
    %v523 = vld [vmem:[%s5 + $0xf8] sm:$0xf]
    %v524 = vld [vmem:[%s5 + $0xfc] sm:$0xff]
    %v525 = vld [vmem:[%s5 + $0x104] sm:$0xf]
    %v526 = vld [vmem:[%s5 + $0x108] sm:$0xff]
    %v527 = vld [vmem:[%s5 + $0x110] sm:$0xf]
    %v528 = vld [vmem:[%s5 + $0x114] sm:$0xff]
    %v529 = vld [vmem:[%s5 + $0x11c] sm:$0xf]
    %v530 = vld [vmem:[%s5 + $0x120] sm:$0xff]
    %v531 = vld [vmem:[%s5 + $0x128] sm:$0xf]
    %v532 = vld [vmem:[%s5 + $0x12c] sm:$0xff]
    %v533 = vld [vmem:[%s5 + $0x134] sm:$0xf]
    %v534 = vld [vmem:[%s5 + $0x138] sm:$0xff]
    %v535 = vld [vmem:[%s5 + $0x140] sm:$0xf]
    %v536 = vld [vmem:[%s5 + $0x144] sm:$0xff]
    %v537 = vld [vmem:[%s5 + $0x14c] sm:$0xf]
    %v538 = vld [vmem:[%s5 + $0x150] sm:$0xff]
    %v539 = vld [vmem:[%s5 + $0x158] sm:$0xf]
    %v540 = vld [vmem:[%s5 + $0x15c] sm:$0xff]
    %v541 = vld [vmem:[%s5 + $0x164] sm:$0xf]
    %v542 = vld [vmem:[%s5 + $0x168] sm:$0xff]
    %v543 = vld [vmem:[%s5 + $0x170] sm:$0xf]
    %v544 = vld [vmem:[%s5 + $0x174] sm:$0xff]
    %v545 = vld [vmem:[%s5 + $0x17c] sm:$0xf]
    %v546 = vld [vmem:[%s6] sm:$0x7]
    %v548 = vperm.slane %v546, 0
    %v549 = vperm.slane %v546, 1
    %v550 = vperm.slane %v546, 2
    %v618 = vunpack.c.l.b16 %v482
    %v619 = vunpack.c.h.b16 %v482
    %v620 = vunpack.c.l.b16 %v483
    %v621 = vunpack.c.l.b16 %v484
    %v622 = vunpack.c.h.b16 %v484
    %v623 = vunpack.c.l.b16 %v485
    %v624 = vunpack.c.l.b16 %v486
    %v625 = vunpack.c.h.b16 %v486
    %v626 = vunpack.c.l.b16 %v487
    %v627 = vunpack.c.l.b16 %v488
    %v628 = vunpack.c.h.b16 %v488
    %v629 = vunpack.c.l.b16 %v489
    %v630 = vunpack.c.l.b16 %v490
    %v631 = vunpack.c.h.b16 %v490
    %v632 = vunpack.c.l.b16 %v491
    %v633 = vunpack.c.l.b16 %v492
    %v634 = vunpack.c.h.b16 %v492
    %v635 = vunpack.c.l.b16 %v493
    %v636 = vunpack.c.l.b16 %v494
    %v637 = vunpack.c.h.b16 %v494
    %v638 = vunpack.c.l.b16 %v495
    %v639 = vunpack.c.l.b16 %v496
    %v640 = vunpack.c.h.b16 %v496
    %v641 = vunpack.c.l.b16 %v497
    %v642 = vunpack.c.l.b16 %v498
    %v643 = vunpack.c.h.b16 %v498
    %v644 = vunpack.c.l.b16 %v499
    %v645 = vunpack.c.l.b16 %v500
    %v646 = vunpack.c.h.b16 %v500
    %v647 = vunpack.c.l.b16 %v501
    %v648 = vunpack.c.l.b16 %v502
    %v649 = vunpack.c.h.b16 %v502
    %v650 = vunpack.c.l.b16 %v503
    %v651 = vunpack.c.l.b16 %v504
    %v652 = vunpack.c.h.b16 %v504
    %v653 = vunpack.c.l.b16 %v505
    %v654 = vunpack.c.l.b16 %v506
    %v655 = vunpack.c.h.b16 %v506
    %v656 = vunpack.c.l.b16 %v507
    %v657 = vunpack.c.l.b16 %v508
    %v658 = vunpack.c.h.b16 %v508
    %v659 = vunpack.c.l.b16 %v509
    %v660 = vunpack.c.l.b16 %v510
    %v661 = vunpack.c.h.b16 %v510
    %v662 = vunpack.c.l.b16 %v511
    %v663 = vunpack.c.l.b16 %v512
    %v664 = vunpack.c.h.b16 %v512
    %v665 = vunpack.c.l.b16 %v513
    %v666 = vunpack.c.l.b16 %v514
    %v667 = vunpack.c.h.b16 %v514
    %v668 = vunpack.c.l.b16 %v515
    %v669 = vunpack.c.l.b16 %v516
    %v670 = vunpack.c.h.b16 %v516
    %v671 = vunpack.c.l.b16 %v517
    %v672 = vunpack.c.l.b16 %v518
    %v673 = vunpack.c.h.b16 %v518
    %v674 = vunpack.c.l.b16 %v519
    %v675 = vunpack.c.l.b16 %v520
    %v676 = vunpack.c.h.b16 %v520
    %v677 = vunpack.c.l.b16 %v521
    %v678 = vunpack.c.l.b16 %v522
    %v679 = vunpack.c.h.b16 %v522
    %v680 = vunpack.c.l.b16 %v523
    %v681 = vunpack.c.l.b16 %v524
    %v682 = vunpack.c.h.b16 %v524
    %v683 = vunpack.c.l.b16 %v525
    %v684 = vunpack.c.l.b16 %v526
    %v685 = vunpack.c.h.b16 %v526
    %v686 = vunpack.c.l.b16 %v527
    %v687 = vunpack.c.l.b16 %v528
    %v688 = vunpack.c.h.b16 %v528
    %v689 = vunpack.c.l.b16 %v529
    %v690 = vunpack.c.l.b16 %v530
    %v691 = vunpack.c.h.b16 %v530
    %v692 = vunpack.c.l.b16 %v531
    %v693 = vunpack.c.l.b16 %v532
    %v694 = vunpack.c.h.b16 %v532
    %v695 = vunpack.c.l.b16 %v533
    %v696 = vunpack.c.l.b16 %v534
    %v697 = vunpack.c.h.b16 %v534
    %v698 = vunpack.c.l.b16 %v535
    %v699 = vunpack.c.l.b16 %v536
    %v700 = vunpack.c.h.b16 %v536
    %v701 = vunpack.c.l.b16 %v537
    %v702 = vunpack.c.l.b16 %v538
    %v703 = vunpack.c.h.b16 %v538
    %v704 = vunpack.c.l.b16 %v539
    %v705 = vunpack.c.l.b16 %v540
    %v706 = vunpack.c.h.b16 %v540
    %v707 = vunpack.c.l.b16 %v541
    %v708 = vunpack.c.l.b16 %v542
    %v709 = vunpack.c.h.b16 %v542
    %v710 = vunpack.c.l.b16 %v543
    %v711 = vunpack.c.l.b16 %v544
    %v712 = vunpack.c.h.b16 %v544
    %v713 = vunpack.c.l.b16 %v545
    %v714 = vpack.c.b16 %v621, %v618
    %v715 = vpack.c.b16 %v622, %v619
    %v716 = vpack.c.b16 %v623, %v620
    %v717 = vpack.c.b16 %v627, %v624
    %v718 = vpack.c.b16 %v628, %v625
    %v719 = vpack.c.b16 %v629, %v626
    %v720 = vpack.c.b16 %v633, %v630
    %v721 = vpack.c.b16 %v634, %v631
    %v722 = vpack.c.b16 %v635, %v632
    %v723 = vpack.c.b16 %v639, %v636
    %v724 = vpack.c.b16 %v640, %v637
    %v725 = vpack.c.b16 %v641, %v638
    %v726 = vpack.c.b16 %v645, %v642
    %v727 = vpack.c.b16 %v646, %v643
    %v728 = vpack.c.b16 %v647, %v644
    %v729 = vpack.c.b16 %v651, %v648
    %v730 = vpack.c.b16 %v652, %v649
    %v731 = vpack.c.b16 %v653, %v650
    %v732 = vpack.c.b16 %v657, %v654
    %v733 = vpack.c.b16 %v658, %v655
    %v734 = vpack.c.b16 %v659, %v656
    %v735 = vpack.c.b16 %v663, %v660
    %v736 = vpack.c.b16 %v664, %v661
    %v737 = vpack.c.b16 %v665, %v662
    %v738 = vpack.c.b16 %v669, %v666
    %v739 = vpack.c.b16 %v670, %v667
    %v740 = vpack.c.b16 %v671, %v668
    %v741 = vpack.c.b16 %v675, %v672
    %v742 = vpack.c.b16 %v676, %v673
    %v743 = vpack.c.b16 %v677, %v674
    %v744 = vpack.c.b16 %v681, %v678
    %v745 = vpack.c.b16 %v682, %v679
    %v746 = vpack.c.b16 %v683, %v680
    %v747 = vpack.c.b16 %v687, %v684
    %v748 = vpack.c.b16 %v688, %v685
    %v749 = vpack.c.b16 %v689, %v686
    %v750 = vpack.c.b16 %v693, %v690
    %v751 = vpack.c.b16 %v694, %v691
    %v752 = vpack.c.b16 %v695, %v692
    %v753 = vpack.c.b16 %v699, %v696
    %v754 = vpack.c.b16 %v700, %v697
    %v755 = vpack.c.b16 %v701, %v698
    %v756 = vpack.c.b16 %v705, %v702
    %v757 = vpack.c.b16 %v706, %v703
    %v758 = vpack.c.b16 %v707, %v704
    %v759 = vpack.c.b16 %v711, %v708
    %v760 = vpack.c.b16 %v712, %v709
    %v761 = vpack.c.b16 %v713, %v710
    %810 = vmatpush.bf16.msra.mxu0 %v735
    %811 = vmatpush.bf16.msra.mxu0 %v732
    %812 = vmatpush.bf16.msra.mxu0 %v729
    %813 = vmatpush.bf16.msra.mxu0 %v726
    %814 = vmatpush.bf16.msra.mxu0 %v723
    %815 = vmatpush.bf16.msra.mxu0 %v720
    %816 = vmatpush.bf16.msra.mxu0 %v717
    %817 = vmatpush.bf16.msra.mxu0 %v714
    %818 = vmatmul.bf16.gmra.mxu0 %v480
    %v819 = vpop.f32.mrf.mxu0
    %v820 = vadd.f32 %v548, %v819
    %v821 = vpop.f32.mrf.mxu0
    %822 = vdwg.mxu0
    %823 = vmatpush.bf16.msra.mxu0 %v759
    %824 = vmatpush.bf16.msra.mxu0 %v756
    %825 = vmatpush.bf16.msra.mxu0 %v753
    %826 = vmatpush.bf16.msra.mxu0 %v750
    %827 = vmatpush.bf16.msra.mxu0 %v747
    %828 = vmatpush.bf16.msra.mxu0 %v744
    %829 = vmatpush.bf16.msra.mxu0 %v741
    %830 = vmatpush.bf16.msra.mxu0 %v738
    %831 = vmatmul.bf16.gmra.mxu0 %v481
    %v832 = vpop.f32.mrf.mxu0
    %v833 = vadd.f32 %v820, %v832
    %v834 = vpop.f32.mrf.mxu0
    %835 = vdwg.mxu0
    %836 = vmatpush.bf16.msra.mxu0 %v736
    %837 = vmatpush.bf16.msra.mxu0 %v733
    %838 = vmatpush.bf16.msra.mxu0 %v730
    %839 = vmatpush.bf16.msra.mxu0 %v727
    %840 = vmatpush.bf16.msra.mxu0 %v724
    %841 = vmatpush.bf16.msra.mxu0 %v721
    %842 = vmatpush.bf16.msra.mxu0 %v718
    %843 = vmatpush.bf16.msra.mxu0 %v715
    %844 = vmatmul.bf16.gmra.mxu0 %v480
    %v845 = vpop.f32.mrf.mxu0
    %v846 = vadd.f32 %v549, %v845
    %v847 = vpop.f32.mrf.mxu0
    %848 = vdwg.mxu0
    %849 = vmatpush.bf16.msra.mxu0 %v760
    %850 = vmatpush.bf16.msra.mxu0 %v757
    %851 = vmatpush.bf16.msra.mxu0 %v754
    %852 = vmatpush.bf16.msra.mxu0 %v751
    %853 = vmatpush.bf16.msra.mxu0 %v748
    %854 = vmatpush.bf16.msra.mxu0 %v745
    %855 = vmatpush.bf16.msra.mxu0 %v742
    %856 = vmatpush.bf16.msra.mxu0 %v739
    %857 = vmatmul.bf16.gmra.mxu0 %v481
    %v858 = vpop.f32.mrf.mxu0
    %v859 = vadd.f32 %v846, %v858
    %v860 = vpop.f32.mrf.mxu0
    %861 = vdwg.mxu0
    %862 = vmatpush.bf16.msra.mxu0 %v737
    %863 = vmatpush.bf16.msra.mxu0 %v734
    %864 = vmatpush.bf16.msra.mxu0 %v731
    %865 = vmatpush.bf16.msra.mxu0 %v728
    %866 = vmatpush.bf16.msra.mxu0 %v725
    %867 = vmatpush.bf16.msra.mxu0 %v722
    %868 = vmatpush.bf16.msra.mxu0 %v719
    %869 = vmatpush.bf16.msra.mxu0 %v716
    %870 = vmatmul.bf16.gmra.mxu0 %v480
    %v871 = vpop.f32.mrf.mxu0
    %v872 = vadd.f32 %v550, %v871
    %v873 = vpop.f32.mrf.mxu0
    %874 = vdwg.mxu0
    %875 = vmatpush.bf16.msra.mxu0 %v761
    %876 = vmatpush.bf16.msra.mxu0 %v758
    %877 = vmatpush.bf16.msra.mxu0 %v755
    %878 = vmatpush.bf16.msra.mxu0 %v752
    %879 = vmatpush.bf16.msra.mxu0 %v749
    %880 = vmatpush.bf16.msra.mxu0 %v746
    %881 = vmatpush.bf16.msra.mxu0 %v743
    %882 = vmatpush.bf16.msra.mxu0 %v740
    %883 = vmatmul.bf16.gmra.mxu0 %v481
    %v884 = vpop.f32.mrf.mxu0
    %v885 = vadd.f32 %v872, %v884
    %v886 = vpop.f32.mrf.mxu0
    %887 = vdwg.mxu0
    %888 = vst [vmem:[#allocation2] sm:$0xff] %v833
    %889 = vst [vmem:[#allocation2 + $0x8] sm:$0xff] %v859
    %890 = vst.msk [vmem:[#allocation2 + $0x10] sm:$0xff] %vm388, %v885
    // Predicated region
    $region30: #{tpu_custom_call.1} parent=1 // pred_check
      _
    $region31: #{tpu_custom_call.1} parent=1 // pred_check_branch
      %892 = sbr.rel (0) target = $region33
    $region32: #{tpu_custom_call.1} parent=1 // pred_region
      %894 = vsyncadd [#allocation3], 0
      %s896 = sshll.u32 [#allocation2], 4
      %s897 = int_to_ptr.vmem [resolvable:$true] %s896
      %s898 = sshll.u32 %s7, 4
      %s899 = int_to_ptr.hbm [resolvable:$true] %s898
      %901 = dma.vmem_to_hbm [thread:$0]  %s897, 384, %s899, [#allocation3]
    $region33: #{tpu_custom_call.1} parent=1 // pred_fallthru
      _
    // Predicated region
    $region34: #{tpu_custom_call.1} parent=1 // pred_check
      _
    $region35: #{tpu_custom_call.1} parent=1 // pred_check_branch
      %903 = sbr.rel (0) target = $region37
    $region36: #{tpu_custom_call.1} parent=1 // pred_region
      %905 = dma.done [#allocation3], 384
    $region37: #{tpu_custom_call.1} parent=1 // pred_fallthru
      _
    %906 = vsyncpa [#allocation3], 1

</llo_original>
